<compile_context>
chip_gen: v6e
topology: v6e:2x2x1
jax: 0.10.0
libtpu: 0.0.40
codegen_flags: <defaults>
</compile_context>

<pallas_src>
import functools

import jax
import jax.numpy as jnp
from jax import lax
from jax.experimental import pallas as pl
from jax.experimental.pallas import tpu as pltpu


def _simclr_kernel(anchor_ref, pos_ref, contrast_ref, out_ref, *,
                   temperature, batch, tile_rows):
    i = pl.program_id(0)
    inv_t = jnp.float32(1.0 / temperature)

    a = anchor_ref[...]                    # [tm, D]  native dtype -> MXU
    c = contrast_ref[...]                  # [D, 2b]  native dtype, resident bank

    # [tm, D] @ [D, 2b] -> [tm, 2b], f32 accumulation on the MXU.
    s = jnp.dot(a, c, preferred_element_type=jnp.float32) * inv_t
    row_max = jnp.max(s, axis=-1, keepdims=True)                      # [tm, 1]
    logits = s - row_max                                              # [tm, 2b]

    # Positive logit via a [tm, D] row-dot against the second view (avoids an
    # iota+mask+reduce pass over the full [tm, 2b] tile; 2b >> D typically).
    af = a.astype(jnp.float32)
    pf = pos_ref[...].astype(jnp.float32)
    pos_s = jnp.sum(af * pf, axis=-1, keepdims=True) * inv_t          # [tm, 1]
    pos_logit = pos_s - row_max

    # Denominator: exclude the self column (col == global row).  Keep the mask
    # formulation -- subtracting exp(self_logit) from the full row sum would
    # catastrophically cancel because the self similarity is typically the max.
    rows, two_b = logits.shape
    col = lax.broadcasted_iota(jnp.int32, (rows, two_b), 1)
    grow = i * tile_rows + lax.broadcasted_iota(jnp.int32, (rows, two_b), 0)
    # TODO(synk): on v6e/v7x the exp could run in bf16 on the EUP (~2x) -- needs
    # explicit accuracy validation, so keep it in f32 here.
    exp_logits = jnp.where(col != grow, jnp.exp(logits), jnp.float32(0.0))
    denom = (jnp.sum(exp_logits, axis=-1, keepdims=True)
             + jnp.float32(jnp.finfo(jnp.float32).eps))               # [tm, 1]

    row_loss = jnp.log(denom) - pos_logit                             # [tm, 1]

    # Rows past the true batch (zero-padded ragged last tile) contribute nothing.
    # Keep jnp.where (not multiplicative masking) so padded rows cannot leak NaN.
    local = lax.broadcasted_iota(jnp.int32, (rows, 1), 0)
    valid = (i * tile_rows + local) < batch
    tile_sum = jnp.sum(jnp.where(valid, row_loss, jnp.float32(0.0)))

    # Per-tile partial sum -> this tile's own output block (no cross-tile carry).
    out_ref[...] = jnp.broadcast_to(tile_sum, out_ref.shape)


def _vmem_limit_bytes(b, dim, tm, itemsize):
    bank = 2 * (dim * 2 * b * itemsize)       # resident bank (worst case 2 buffers)
    tiles = 2 * 2 * (tm * dim * itemsize)     # anchor + positive view, double-buffered
    inter = 4 * (tm * 2 * b * 4)              # s / logits / exp / mask f32 temporaries
    need = bank + tiles + inter + (4 << 20)   # + slack for Mosaic-internal scratch
    try:
        physical = int(pltpu.get_tpu_info().vmem_capacity_bytes)
    except Exception:
        physical = 64 << 20                   # conservative: v7x per-core VMEM
    cap = min(100 << 20, int(physical * 0.8))
    # TODO(synk): if need > cap (very large b*dim, esp. on v7x), tile the 2b
    # contrast axis and switch to an online (flash-style) running max/sum.
    return max(16 << 20, min(need, cap))


def simclr_loss(features, *, temperature=0.5, block_rows=256):
    """block_rows: 256 fills the 256-wide MXU on v6e/v7x; use 128 on v5e."""
    b, n, dim = features.shape
    assert n == 2, "SimCLRLoss expects exactly two views per example"

    anchors = features[:, 0, :]                                   # [b, D]
    pos_view = features[:, 1, :]                                  # [b, D]
    # MXU-canonical resident bank: [D, 2b] (cols 0..b-1 = view0, b..2b-1 = view1).
    contrast_t = jnp.concatenate([anchors, pos_view], axis=0).T   # [D, 2b]

    tm = min(int(block_rows), b)
    tm = ((tm + 7) // 8) * 8                  # keep the sublane tile 8-aligned
    num_tiles = pl.cdiv(b, tm)
    bp = num_tiles * tm
    if bp != b:                               # zero-pad the ragged last tile
        pad = ((0, bp - b), (0, 0))
        anchors = jnp.pad(anchors, pad)
        pos_view = jnp.pad(pos_view, pad)

    kernel = functools.partial(_simclr_kernel, temperature=float(temperature),
                               batch=b, tile_rows=tm)
    itemsize = jnp.dtype(features.dtype).itemsize
    vmem_limit = _vmem_limit_bytes(b, dim, tm, itemsize)
    cost = pl.CostEstimate(
        flops=2 * b * (2 * b) * dim + 4 * b * dim,
        transcendentals=b * (2 * b) + b,
        bytes_accessed=(2 * bp * dim + 2 * b * dim) * itemsize + num_tiles * 128 * 4,
    )

    def build(single_buffer_bank):
        bank_kwargs = {"pipeline_mode": pl.Buffered(1)} if single_buffer_bank else {}
        grid_spec = pltpu.PrefetchScalarGridSpec(
            num_scalar_prefetch=0,
            grid=(num_tiles,),
            in_specs=[
                pl.BlockSpec((tm, dim), lambda i: (i, 0)),        # anchor tile
                pl.BlockSpec((tm, dim), lambda i: (i, 0)),        # positive-view tile
                pl.BlockSpec((dim, 2 * b), lambda i: (0, 0),      # resident bank
                             **bank_kwargs),
            ],
            out_specs=pl.BlockSpec((1, 1, 128), lambda i: (i, 0, 0)),
        )
        return pl.pallas_call(
            kernel,
            out_shape=jax.ShapeDtypeStruct((num_tiles, 1, 128), jnp.float32),
            grid_spec=grid_spec,
            compiler_params=pltpu.CompilerParams(
                # No cross-tile carry -> batch tiles are independent and may be
                # split across TensorCores (v7x megacore).
                dimension_semantics=("parallel",),
                vmem_limit_bytes=vmem_limit,
            ),
            cost_estimate=cost,
        )

    try:
        partials = build(True)(anchors, pos_view, contrast_t)
    except Exception:
        # This jax/Mosaic version rejected pl.Buffered(1) on the resident bank;
        # fall back to the default (double-buffered) spec -- identical results.
        partials = build(False)(anchors, pos_view, contrast_t)

    return jnp.sum(partials[:, 0, 0]) / jnp.float32(b)


def _reference(features, temperature):
    """Pure-JAX transcription of the PyTorch SimCLRLoss.forward."""
    b = features.shape[0]
    anchor = features[:, 0]
    contrast = jnp.concatenate([features[:, 0], features[:, 1]], axis=0)
    dot = jnp.matmul(anchor, contrast.T) / temperature
    logits = dot - jnp.max(dot, axis=1, keepdims=True)
    mask = jnp.tile(jnp.eye(b, dtype=jnp.float32), (1, 2))
    logits_mask = jnp.ones((b, 2 * b), jnp.float32).at[
        jnp.arange(b), jnp.arange(b)].set(0.0)
    mask = mask * logits_mask
    exp_logits = jnp.exp(logits) * logits_mask
    log_prob = logits - jnp.log(exp_logits.sum(1, keepdims=True)
                                + jnp.finfo(jnp.float32).eps)
    return -((mask * log_prob).sum(1) / mask.sum(1)).mean()


if __name__ == "__main__":
    TEMPERATURE = 0.5

    # --- small single-tile path ---
    B, DIM = 8, 32
    feats = jax.random.normal(jax.random.PRNGKey(0), (B, 2, DIM), dtype=jnp.float32)
    loss = simclr_loss(feats, temperature=TEMPERATURE)
    jax.block_until_ready(loss)
    ref = _reference(feats, TEMPERATURE)
    assert jnp.allclose(loss, ref, atol=1e-4, rtol=1e-4), (loss, ref)

    # --- multi-tile path (grid + per-tile partial outputs + parallel batch axis) ---
    B2, DIM2 = 192, 64
    feats2 = jax.random.normal(jax.random.PRNGKey(1), (B2, 2, DIM2), dtype=jnp.float32)
    loss2 = simclr_loss(feats2, temperature=TEMPERATURE, block_rows=64)
    jax.block_until_ready(loss2)
    ref2 = _reference(feats2, TEMPERATURE)
    assert jnp.allclose(loss2, ref2, atol=1e-4, rtol=1e-4), (loss2, ref2)

    # --- ragged last tile (zero padding + valid-row masking) ---
    B3, DIM3 = 100, 128
    feats3 = jax.random.normal(jax.random.PRNGKey(2), (B3, 2, DIM3), dtype=jnp.float32)
    loss3 = simclr_loss(feats3, temperature=TEMPERATURE, block_rows=64)
    jax.block_until_ready(loss3)
    ref3 = _reference(feats3, TEMPERATURE)
    assert jnp.allclose(loss3, ref3, atol=1e-4, rtol=1e-4), (loss3, ref3)

    print("KERNEL_OK")
</pallas_src>

<mosaic_0001>
module attributes {stable_mosaic.version = 11 : i64} {
  func.func @_simclr_kernel(%arg0: i32, %arg1: memref<8x32xf32, #tpu.memory_space<vmem>>, %arg2: memref<8x32xf32, #tpu.memory_space<vmem>>, %arg3: memref<32x16xf32, #tpu.memory_space<vmem>>, %arg4: memref<1x1x128xf32, #tpu.memory_space<vmem>>) attributes {dimension_semantics = [#tpu.dimension_semantics<parallel>], iteration_bounds = array<i64: 1>, scalar_prefetch = 0 : i64, scratch_operands = 0 : i64, tpu.core_type = #tpu.core_type<tc>, window_params = [{transform_indices = @transform_0, window_bounds = array<i64: 8, 32>}, {transform_indices = @transform_1, window_bounds = array<i64: 8, 32>}, {pipeline_mode = #tpu.pipeline_mode<synchronous>, transform_indices = @transform_2, window_bounds = array<i64: 32, 16>}, {transform_indices = @transform_3, window_bounds = array<i64: 1, 1, 128>}]} {
    %c0 = arith.constant 0 : index
    %c0_0 = arith.constant 0 : index
    %0 = vector.load %arg1[%c0, %c0_0] : memref<8x32xf32, #tpu.memory_space<vmem>>, vector<8x32xf32>
    %c0_1 = arith.constant 0 : index
    %c0_2 = arith.constant 0 : index
    %1 = vector.load %arg3[%c0_1, %c0_2] : memref<32x16xf32, #tpu.memory_space<vmem>>, vector<32x16xf32>
    %cst = arith.constant dense<0.000000e+00> : vector<8x16xf32>
    %2 = tpu.matmul %0, %1, %cst {dimension_numbers = #tpu.dot_dimension_numbers<[1], [0], [0], [1], [0, 0, 1, 1], [], []>} : vector<8x32xf32>, vector<32x16xf32>, vector<8x16xf32> -> vector<8x16xf32>
    %cst_3 = arith.constant 2.000000e+00 : f32
    %3 = vector.broadcast %cst_3 : f32 to vector<8x16xf32>
    %4 = arith.mulf %2, %3 : vector<8x16xf32>
    %cst_4 = arith.constant dense<0xFF800000> : vector<8xf32>
    %5 = vector.multi_reduction <maximumf>, %4, %cst_4 [1] : vector<8x16xf32> to vector<8xf32>
    %6 = vector.shape_cast %5 : vector<8xf32> to vector<8x1xf32>
    %7 = vector.broadcast %6 : vector<8x1xf32> to vector<8x16xf32>
    %8 = arith.subf %4, %7 : vector<8x16xf32>
    %c0_5 = arith.constant 0 : index
    %c0_6 = arith.constant 0 : index
    %9 = vector.load %arg2[%c0_5, %c0_6] : memref<8x32xf32, #tpu.memory_space<vmem>>, vector<8x32xf32>
    %10 = arith.mulf %0, %9 : vector<8x32xf32>
    %cst_7 = arith.constant dense<0.000000e+00> : vector<8xf32>
    %11 = vector.multi_reduction <add>, %10, %cst_7 [1] : vector<8x32xf32> to vector<8xf32>
    %12 = vector.shape_cast %11 : vector<8xf32> to vector<8x1xf32>
    %cst_8 = arith.constant 2.000000e+00 : f32
    %13 = vector.broadcast %cst_8 : f32 to vector<8x1xf32>
    %14 = arith.mulf %12, %13 : vector<8x1xf32>
    %15 = arith.subf %14, %6 : vector<8x1xf32>
    %16 = tpu.iota {dimensions = array<i32: 1>} : vector<8x16xi32>
    %c8_i32 = arith.constant 8 : i32
    %17 = arith.muli %arg0, %c8_i32 : i32
    %18 = tpu.iota {dimensions = array<i32: 0>} : vector<8x16xi32>
    %19 = vector.broadcast %17 : i32 to vector<8x16xi32>
    %20 = arith.addi %19, %18 : vector<8x16xi32>
    %21 = arith.cmpi ne, %16, %20 : vector<8x16xi32>
    %22 = math.exp %8 : vector<8x16xf32>
    %cst_9 = arith.constant 0.000000e+00 : f32
    %23 = vector.broadcast %cst_9 : f32 to vector<8x16xf32>
    %24 = arith.select %21, %22, %23 : vector<8x16xi1>, vector<8x16xf32>
    %cst_10 = arith.constant dense<0.000000e+00> : vector<8xf32>
    %25 = vector.multi_reduction <add>, %24, %cst_10 [1] : vector<8x16xf32> to vector<8xf32>
    %26 = vector.shape_cast %25 : vector<8xf32> to vector<8x1xf32>
    %cst_11 = arith.constant 1.1920929E-7 : f32
    %27 = vector.broadcast %cst_11 : f32 to vector<8x1xf32>
    %28 = arith.addf %26, %27 : vector<8x1xf32>
    %29 = math.log %28 : vector<8x1xf32>
    %30 = arith.subf %29, %15 : vector<8x1xf32>
    %31 = tpu.iota {dimensions = array<i32: 0>} : vector<8x1xi32>
    %c8_i32_12 = arith.constant 8 : i32
    %32 = arith.muli %arg0, %c8_i32_12 : i32
    %33 = vector.broadcast %32 : i32 to vector<8x1xi32>
    %34 = arith.addi %33, %31 : vector<8x1xi32>
    %c8_i32_13 = arith.constant 8 : i32
    %35 = vector.broadcast %c8_i32_13 : i32 to vector<8x1xi32>
    %36 = arith.cmpi slt, %34, %35 : vector<8x1xi32>
    %cst_14 = arith.constant 0.000000e+00 : f32
    %37 = vector.broadcast %cst_14 : f32 to vector<8x1xf32>
    %38 = arith.select %36, %30, %37 : vector<8x1xi1>, vector<8x1xf32>
    %39 = vector.shape_cast %38 : vector<8x1xf32> to vector<1x8x1xf32>
    %cst_15 = arith.constant dense<0.000000e+00> : vector<1xf32>
    %40 = vector.multi_reduction <add>, %39, %cst_15 [1, 2] : vector<1x8x1xf32> to vector<1xf32>
    %41 = vector.shape_cast %40 : vector<1xf32> to vector<1x1x1xf32>
    %42 = vector.extract %41[0, 0, 0] : f32 from vector<1x1x1xf32>
    %43 = vector.broadcast %42 : f32 to vector<1x1x128xf32>
    %c0_16 = arith.constant 0 : index
    %c0_17 = arith.constant 0 : index
    %c0_18 = arith.constant 0 : index
    %44 = vector.load %arg4[%c0_16, %c0_17, %c0_18] : memref<1x1x128xf32, #tpu.memory_space<vmem>>, vector<1x1x128xf32>
    tpu.vector_store %arg4[%c0_16, %c0_17, %c0_18], %43 {strides = array<i32>} : memref<1x1x128xf32, #tpu.memory_space<vmem>>, vector<1x1x128xf32>,
    return
  }
  func.func @transform_0(%arg0: i32) -> (i32, i32) {
    %c0_i32 = arith.constant 0 : i32
    %c0_i32_0 = arith.constant 0 : i32
    return %arg0, %c0_i32 : i32, i32
  }
  func.func @transform_1(%arg0: i32) -> (i32, i32) {
    %c0_i32 = arith.constant 0 : i32
    %c0_i32_0 = arith.constant 0 : i32
    return %arg0, %c0_i32 : i32, i32
  }
  func.func @transform_2(%arg0: i32) -> (i32, i32) {
    %c0_i32 = arith.constant 0 : i32
    %c0_i32_0 = arith.constant 0 : i32
    %c0_i32_1 = arith.constant 0 : i32
    return %c0_i32, %c0_i32_0 : i32, i32
  }
  func.func @transform_3(%arg0: i32) -> (i32, i32, i32) {
    %c0_i32 = arith.constant 0 : i32
    %c0_i32_0 = arith.constant 0 : i32
    %c0_i32_1 = arith.constant 0 : i32
    return %arg0, %c0_i32, %c0_i32_0 : i32, i32, i32
  }
}

module attributes {stable_mosaic.version = 11 : i64} {
  func.func @_simclr_kernel(%arg0: i32, %arg1: memref<8x32xf32, #tpu.memory_space<vmem>>, %arg2: memref<8x32xf32, #tpu.memory_space<vmem>>, %arg3: memref<32x16xf32, #tpu.memory_space<vmem>>, %arg4: memref<1x1x128xf32, #tpu.memory_space<vmem>>) attributes {dimension_semantics = [#tpu.dimension_semantics<parallel>], iteration_bounds = array<i64: 1>, scalar_prefetch = 0 : i64, scratch_operands = 0 : i64, tpu.core_type = #tpu.core_type<tc>, window_params = [{transform_indices = @transform_0, window_bounds = array<i64: 8, 32>}, {transform_indices = @transform_1, window_bounds = array<i64: 8, 32>}, {pipeline_mode = #tpu.pipeline_mode<synchronous>, transform_indices = @transform_2, window_bounds = array<i64: 32, 16>}, {transform_indices = @transform_3, window_bounds = array<i64: 1, 1, 128>}]} {
    %c0 = arith.constant 0 : index
    %c0_0 = arith.constant 0 : index
    %0 = vector.load %arg1[%c0, %c0_0] : memref<8x32xf32, #tpu.memory_space<vmem>>, vector<8x32xf32>
    %c0_1 = arith.constant 0 : index
    %c0_2 = arith.constant 0 : index
    %1 = vector.load %arg3[%c0_1, %c0_2] : memref<32x16xf32, #tpu.memory_space<vmem>>, vector<32x16xf32>
    %cst = arith.constant dense<0.000000e+00> : vector<8x16xf32>
    %2 = tpu.matmul %0, %1, %cst {dimension_numbers = #tpu.dot_dimension_numbers<[1], [0], [0], [1], [0, 0, 1, 1], [], []>} : vector<8x32xf32>, vector<32x16xf32>, vector<8x16xf32> -> vector<8x16xf32>
    %cst_3 = arith.constant 2.000000e+00 : f32
    %3 = vector.broadcast %cst_3 : f32 to vector<8x16xf32>
    %4 = arith.mulf %2, %3 : vector<8x16xf32>
    %cst_4 = arith.constant dense<0xFF800000> : vector<8xf32>
    %5 = vector.multi_reduction <maximumf>, %4, %cst_4 [1] : vector<8x16xf32> to vector<8xf32>
    %6 = vector.shape_cast %5 : vector<8xf32> to vector<8x1xf32>
    %7 = vector.broadcast %6 : vector<8x1xf32> to vector<8x16xf32>
    %8 = arith.subf %4, %7 : vector<8x16xf32>
    %c0_5 = arith.constant 0 : index
    %c0_6 = arith.constant 0 : index
    %9 = vector.load %arg2[%c0_5, %c0_6] : memref<8x32xf32, #tpu.memory_space<vmem>>, vector<8x32xf32>
    %10 = arith.mulf %0, %9 : vector<8x32xf32>
    %cst_7 = arith.constant dense<0.000000e+00> : vector<8xf32>
    %11 = vector.multi_reduction <add>, %10, %cst_7 [1] : vector<8x32xf32> to vector<8xf32>
    %12 = vector.shape_cast %11 : vector<8xf32> to vector<8x1xf32>
    %cst_8 = arith.constant 2.000000e+00 : f32
    %13 = vector.broadcast %cst_8 : f32 to vector<8x1xf32>
    %14 = arith.mulf %12, %13 : vector<8x1xf32>
    %15 = arith.subf %14, %6 : vector<8x1xf32>
    %16 = tpu.iota {dimensions = array<i32: 1>} : vector<8x16xi32>
    %c8_i32 = arith.constant 8 : i32
    %17 = arith.muli %arg0, %c8_i32 : i32
    %18 = tpu.iota {dimensions = array<i32: 0>} : vector<8x16xi32>
    %19 = vector.broadcast %17 : i32 to vector<8x16xi32>
    %20 = arith.addi %19, %18 : vector<8x16xi32>
    %21 = arith.cmpi ne, %16, %20 : vector<8x16xi32>
    %22 = math.exp %8 : vector<8x16xf32>
    %cst_9 = arith.constant 0.000000e+00 : f32
    %23 = vector.broadcast %cst_9 : f32 to vector<8x16xf32>
    %24 = arith.select %21, %22, %23 : vector<8x16xi1>, vector<8x16xf32>
    %cst_10 = arith.constant dense<0.000000e+00> : vector<8xf32>
    %25 = vector.multi_reduction <add>, %24, %cst_10 [1] : vector<8x16xf32> to vector<8xf32>
    %26 = vector.shape_cast %25 : vector<8xf32> to vector<8x1xf32>
    %cst_11 = arith.constant 1.1920929E-7 : f32
    %27 = vector.broadcast %cst_11 : f32 to vector<8x1xf32>
    %28 = arith.addf %26, %27 : vector<8x1xf32>
    %29 = math.log %28 : vector<8x1xf32>
    %30 = arith.subf %29, %15 : vector<8x1xf32>
    %31 = tpu.iota {dimensions = array<i32: 0>} : vector<8x1xi32>
    %c8_i32_12 = arith.constant 8 : i32
    %32 = arith.muli %arg0, %c8_i32_12 : i32
    %33 = vector.broadcast %32 : i32 to vector<8x1xi32>
    %34 = arith.addi %33, %31 : vector<8x1xi32>
    %c8_i32_13 = arith.constant 8 : i32
    %35 = vector.broadcast %c8_i32_13 : i32 to vector<8x1xi32>
    %36 = arith.cmpi slt, %34, %35 : vector<8x1xi32>
    %cst_14 = arith.constant 0.000000e+00 : f32
    %37 = vector.broadcast %cst_14 : f32 to vector<8x1xf32>
    %38 = arith.select %36, %30, %37 : vector<8x1xi1>, vector<8x1xf32>
    %39 = vector.shape_cast %38 : vector<8x1xf32> to vector<1x8x1xf32>
    %cst_15 = arith.constant dense<0.000000e+00> : vector<1xf32>
    %40 = vector.multi_reduction <add>, %39, %cst_15 [1, 2] : vector<1x8x1xf32> to vector<1xf32>
    %41 = vector.shape_cast %40 : vector<1xf32> to vector<1x1x1xf32>
    %42 = vector.extract %41[0, 0, 0] : f32 from vector<1x1x1xf32>
    %43 = vector.broadcast %42 : f32 to vector<1x1x128xf32>
    %c0_16 = arith.constant 0 : index
    %c0_17 = arith.constant 0 : index
    %c0_18 = arith.constant 0 : index
    %44 = vector.load %arg4[%c0_16, %c0_17, %c0_18] : memref<1x1x128xf32, #tpu.memory_space<vmem>>, vector<1x1x128xf32>
    tpu.vector_store %arg4[%c0_16, %c0_17, %c0_18], %43 {strides = array<i32>} : memref<1x1x128xf32, #tpu.memory_space<vmem>>, vector<1x1x128xf32>,
    return
  }
  func.func @transform_0(%arg0: i32) -> (i32, i32) {
    %c0_i32 = arith.constant 0 : i32
    %c0_i32_0 = arith.constant 0 : i32
    return %arg0, %c0_i32 : i32, i32
  }
  func.func @transform_1(%arg0: i32) -> (i32, i32) {
    %c0_i32 = arith.constant 0 : i32
    %c0_i32_0 = arith.constant 0 : i32
    return %arg0, %c0_i32 : i32, i32
  }
  func.func @transform_2(%arg0: i32) -> (i32, i32) {
    %c0_i32 = arith.constant 0 : i32
    %c0_i32_0 = arith.constant 0 : i32
    %c0_i32_1 = arith.constant 0 : i32
    return %c0_i32, %c0_i32_0 : i32, i32
  }
  func.func @transform_3(%arg0: i32) -> (i32, i32, i32) {
    %c0_i32 = arith.constant 0 : i32
    %c0_i32_0 = arith.constant 0 : i32
    %c0_i32_1 = arith.constant 0 : i32
    return %arg0, %c0_i32, %c0_i32_0 : i32, i32, i32
  }
}

</mosaic_0001>

<llo_original>
// kernel: tpu_custom_call.1
$region0: #{tpu_custom_call.1}
  #allocation0 [shape = 'u32[]', space=smem, size = 0x4, offset = 0x4, fixed_abs, tag = 'smem constant byte address 0x4 - core index']
  #allocation1 [shape = 'u32[144,128]{1,0:T(1,128)}', space=vmem, size = 0x12000, scoped, tag = 'internal scratch']
  %s0 = inlined_call_operand.vmem [shape: f32[8,32], index: 0, kind: input, shape index: {}]
  %s1 = inlined_call_operand.vmem [shape: f32[8,32], index: 1, kind: input, shape index: {}]
  %s2 = inlined_call_operand.vmem [shape: f32[32,16], index: 2, kind: input, shape index: {}]
  %s3 = inlined_call_operand.hbm [shape: f32[1,1,128], index: 3, kind: output, shape index: {}]
  %s4 = sld [smem:[#allocation0]]
  $region22: #{tpu_custom_call.1} parent=0
    _
  %s6 = ssub.s32 1, %s4
  %s7 = scalar_select 0, %s6, %s4
  $region1: #{tpu_custom_call.1} parent=0
    #allocation2 [shape = 'u8[512]{0}', space=vmem, size = 0x400, scoped, tag = 'output window, operand 0, single buffered']
    #allocation3 [shape = 's32[1]{0}', space=sflag, size = 0x4, scoped, tag = 'scoped memory for tpu_custom_call.1']
    %8 = vsyncpa [#allocation3], 0
    // Predicated region
    $region2: #{tpu_custom_call.1} parent=1 // pred_check
      _
    $region3: #{tpu_custom_call.1} parent=1 // pred_check_branch
      %10 = sbr.rel (0) target = $region5
    $region4: #{tpu_custom_call.1} parent=1 // pred_region
      _
    $region5: #{tpu_custom_call.1} parent=1 // pred_fallthru
      _
    // Predicated region
    $region6: #{tpu_custom_call.1} parent=1 // pred_check
      _
    $region7: #{tpu_custom_call.1} parent=1 // pred_check_branch
      %12 = sbr.rel (0) target = $region9
    $region8: #{tpu_custom_call.1} parent=1 // pred_region
      _
    $region9: #{tpu_custom_call.1} parent=1 // pred_fallthru
      _
    // Predicated region
    $region10: #{tpu_custom_call.1} parent=1 // pred_check
      _
    $region11: #{tpu_custom_call.1} parent=1 // pred_check_branch
      %14 = sbr.rel (0) target = $region13
    $region12: #{tpu_custom_call.1} parent=1 // pred_region
      _
    $region13: #{tpu_custom_call.1} parent=1 // pred_fallthru
      _
    %v15 = vld [vmem:[%s0] sm:$0xff]
    %v16 = vld [vmem:[%s2] sm:$0xff]
    %v17 = vld [vmem:[%s2 + $0x8] sm:$0xff]
    %v18 = vld [vmem:[%s2 + $0x10] sm:$0xff]
    %v19 = vld [vmem:[%s2 + $0x18] sm:$0xff]
    %vm20 = vcmask 261120
    %v22 = vsel %vm20, %v15, 0
    %24 = vmatprep.subr.mxu0 0.0
    %25 = vmatpush1.msra.mxu0 0.0
    %26 = vmatprep.subr.mxu0 0.0
    %27 = vmatpush1.msra.mxu0 0.0
    %28 = vmatprep.subr.mxu0 0.0
    %29 = vmatpush1.msra.mxu0 0.0
    %30 = vmatprep.subr.mxu0 0.0
    %31 = vmatpush1.msra.mxu0 0.0
    %32 = vmatprep.subr.mxu0 0.0
    %33 = vmatpush1.msra.mxu0 0.0
    %34 = vmatprep.subr.mxu0 0.0
    %35 = vmatpush1.msra.mxu0 0.0
    %36 = vmatprep.subr.mxu0 0.0
    %37 = vmatpush1.msra.mxu0 0.0
    %38 = vmatprep.subr.mxu0 0.0
    %39 = vmatpush1.msra.mxu0 0.0
    %40 = vmatprep.subr.mxu0 0.0
    %41 = vmatpush1.msra.mxu0 0.0
    %42 = vmatprep.subr.mxu0 0.0
    %43 = vmatpush1.msra.mxu0 0.0
    %44 = vmatprep.subr.mxu0 0.0
    %45 = vmatpush1.msra.mxu0 0.0
    %46 = vmatprep.subr.mxu0 0.0
    %47 = vmatpush1.msra.mxu0 0.0
    %48 = vmatprep.subr.mxu0 0.0
    %49 = vmatpush1.msra.mxu0 %v19
    %50 = vmatprep.subr.mxu0 0.0
    %51 = vmatpush1.msra.mxu0 %v18
    %52 = vmatprep.subr.mxu0 0.0
    %53 = vmatpush1.msra.mxu0 %v17
    %54 = vmatprep.subr.mxu0 0.0
    %55 = vmatpush1.msra.mxu0 %v16
    %56 = vmatprep.subr.mxu0 0.0
    %57 = vmatpush2.msra.mxu0 0.0
    %58 = vmatprep.subr.mxu0 0.0
    %59 = vmatpush2.msra.mxu0 0.0
    %60 = vmatprep.subr.mxu0 0.0
    %61 = vmatpush2.msra.mxu0 0.0
    %62 = vmatprep.subr.mxu0 0.0
    %63 = vmatpush2.msra.mxu0 0.0
    %64 = vmatprep.subr.mxu0 0.0
    %65 = vmatpush2.msra.mxu0 0.0
    %66 = vmatprep.subr.mxu0 0.0
    %67 = vmatpush2.msra.mxu0 0.0
    %68 = vmatprep.subr.mxu0 0.0
    %69 = vmatpush2.msra.mxu0 0.0
    %70 = vmatprep.subr.mxu0 0.0
    %71 = vmatpush2.msra.mxu0 0.0
    %72 = vmatprep.subr.mxu0 0.0
    %73 = vmatpush2.msra.mxu0 0.0
    %74 = vmatprep.subr.mxu0 0.0
    %75 = vmatpush2.msra.mxu0 0.0
    %76 = vmatprep.subr.mxu0 0.0
    %77 = vmatpush2.msra.mxu0 0.0
    %78 = vmatprep.subr.mxu0 0.0
    %79 = vmatpush2.msra.mxu0 0.0
    %80 = vmatprep.subr.mxu0 0.0
    %81 = vmatpush2.msra.mxu0 0.0
    %82 = vmatprep.subr.mxu0 0.0
    %83 = vmatpush2.msra.mxu0 0.0
    %84 = vmatprep.subr.mxu0 0.0
    %85 = vmatpush2.msra.mxu0 0.0
    %86 = vmatprep.subr.mxu0 0.0
    %87 = vmatpush2.msra.mxu0 0.0
    %88 = vmatprep.mubr.f32.mxu0 0.0
    %89 = vmatmul.mubr.f32.gmra.mxu0 %v22
    %v90 = vpop.f32.mrf.mxu0
    %v91 = vadd.f32 0.0, %v90
    %v92 = vpop.f32.mrf.mxu0
    %93 = vdwg.mxu0
    %v94 = vmul.f32 %v91, 2.0
    %vm95 = vcmask 130048
    %v96 = vsel %vm95, %v94, -inf
    %97 = vmax.xlane.f32.xlu0 %v96
    %v98 = vpop.xlane.xlu0 %97
    %v99 = vsub.f32 %v94, %v98
    %v100 = vld [vmem:[%s1] sm:$0xff]
    %v101 = vmul.f32 %v15, %v100
    %v102 = vsel %vm20, %v101, 0.0
    %103 = vadd.xlane.f32.xlu0 %v102
    %v104 = vpop.xlane.xlu0 %103
    %v105 = vmul.f32 %v104, 2.0
    %v106 = vsub.f32 %v105, %v98
    %v107 = vlaneseq
    %v108 = vand.u32 %v107, 127
    %s109 = smul.u32 0, 8
    %v110 = vlaneseq
    %v111 = vshrl.u32 %v110, 7
    %v112 = vstv %s109
    %v113 = vadd.s32 %v112, %v111
    %vm114 = vcmp.ne.s32.totalorder %v108, %v113
    %v115 = vmul.f32 %v99, 1.442695
    %v116 = vpow.pop %v115
    %v117 = vsel %vm114, %v116, 0.0
    %v118 = vsel %vm95, %v117, 0.0
    %119 = vadd.xlane.f32.xlu0 %v118
    %v120 = vpop.xlane.xlu0 %119
    %v121 = vadd.f32 %v120, 1.1920929e-07
    %v122 = vlog2.pop %v121
    %v123 = vmul.f32 %v122, 0.6931472
    %v124 = vsub.f32 %v123, %v106
    %vm125 = vcmp.lt.s32.totalorder %v113, 8
    %v126 = vsel %vm125, %v124, 0.0
    %vm127 = vcmask 7168
    %v128 = vsel %vm127, %v126, 0.0
    %129 = vadd.xlane.f32.xlu0 %v128
    %v130 = vpop.xlane.xlu0 %129
    %v131 = vrot.slane %v130, 4
    %v132 = vadd.f32 %v130, %v131
    %v133 = vrot.slane %v132, 2
    %v134 = vadd.f32 %v132, %v133
    %v135 = vrot.slane %v134, 1
    %v136 = vadd.f32 %v134, %v135
    %s137 = vtos %v136
    %v138 = vstv %s137
    %139 = vst [vmem:[#allocation2] sm:$0x1] %v138
    // Predicated region
    $region14: #{tpu_custom_call.1} parent=1 // pred_check
      _
    $region15: #{tpu_custom_call.1} parent=1 // pred_check_branch
      %141 = sbr.rel (0) target = $region17
    $region16: #{tpu_custom_call.1} parent=1 // pred_region
      %s143 = ssub.s32 16, 16
      %144 = vsyncadd [#allocation3], %s143
      %s146 = sshll.u32 [#allocation2], 4
      %s147 = int_to_ptr.vmem [resolvable:$true] %s146
      %149 = dma.vmem_to_hbm [thread:$0]  %s147, 16, %s3, [#allocation3]
    $region17: #{tpu_custom_call.1} parent=1 // pred_fallthru
      _
    // Predicated region
    $region18: #{tpu_custom_call.1} parent=1 // pred_check
      _
    $region19: #{tpu_custom_call.1} parent=1 // pred_check_branch
      %151 = sbr.rel (0) target = $region21
    $region20: #{tpu_custom_call.1} parent=1 // pred_region
      %152 = dma.done [#allocation3], 16
    $region21: #{tpu_custom_call.1} parent=1 // pred_fallthru
      _
    %153 = vsyncpa [#allocation3], 1

// kernel: tpu_custom_call.1
$region0: #{tpu_custom_call.1}
  #allocation0 [shape = 'u32[]', space=smem, size = 0x4, offset = 0x4, fixed_abs, tag = 'smem constant byte address 0x4 - core index']
  #allocation1 [shape = 'u32[144,128]{1,0:T(1,128)}', space=vmem, size = 0x12000, scoped, tag = 'internal scratch']
  %s0 = inlined_call_operand.vmem [shape: f32[8,32], index: 0, kind: input, shape index: {}]
  %s1 = inlined_call_operand.vmem [shape: f32[8,32], index: 1, kind: input, shape index: {}]
  %s2 = inlined_call_operand.vmem [shape: f32[32,16], index: 2, kind: input, shape index: {}]
  %s3 = inlined_call_operand.hbm [shape: f32[1,1,128], index: 3, kind: output, shape index: {}]
  %s4 = sld [smem:[#allocation0]]
  $region22: #{tpu_custom_call.1} parent=0
    _
  %s6 = ssub.s32 1, %s4
  %s7 = scalar_select 0, %s6, %s4
  $region1: #{tpu_custom_call.1} parent=0
    #allocation2 [shape = 'u8[512]{0}', space=vmem, size = 0x400, scoped, tag = 'output window, operand 0, single buffered']
    #allocation3 [shape = 's32[1]{0}', space=sflag, size = 0x4, scoped, tag = 'scoped memory for tpu_custom_call.1']
    %8 = vsyncpa [#allocation3], 0
    // Predicated region
    $region2: #{tpu_custom_call.1} parent=1 // pred_check
      _
    $region3: #{tpu_custom_call.1} parent=1 // pred_check_branch
      %10 = sbr.rel (0) target = $region5
    $region4: #{tpu_custom_call.1} parent=1 // pred_region
      _
    $region5: #{tpu_custom_call.1} parent=1 // pred_fallthru
      _
    // Predicated region
    $region6: #{tpu_custom_call.1} parent=1 // pred_check
      _
    $region7: #{tpu_custom_call.1} parent=1 // pred_check_branch
      %12 = sbr.rel (0) target = $region9
    $region8: #{tpu_custom_call.1} parent=1 // pred_region
      _
    $region9: #{tpu_custom_call.1} parent=1 // pred_fallthru
      _
    // Predicated region
    $region10: #{tpu_custom_call.1} parent=1 // pred_check
      _
    $region11: #{tpu_custom_call.1} parent=1 // pred_check_branch
      %14 = sbr.rel (0) target = $region13
    $region12: #{tpu_custom_call.1} parent=1 // pred_region
      _
    $region13: #{tpu_custom_call.1} parent=1 // pred_fallthru
      _
    %v15 = vld [vmem:[%s0] sm:$0xff]
    %v16 = vld [vmem:[%s2] sm:$0xff]
    %v17 = vld [vmem:[%s2 + $0x8] sm:$0xff]
    %v18 = vld [vmem:[%s2 + $0x10] sm:$0xff]
    %v19 = vld [vmem:[%s2 + $0x18] sm:$0xff]
    %vm20 = vcmask 261120
    %v22 = vsel %vm20, %v15, 0
    %24 = vmatprep.subr.mxu0 0.0
    %25 = vmatpush1.msra.mxu0 0.0
    %26 = vmatprep.subr.mxu0 0.0
    %27 = vmatpush1.msra.mxu0 0.0
    %28 = vmatprep.subr.mxu0 0.0
    %29 = vmatpush1.msra.mxu0 0.0
    %30 = vmatprep.subr.mxu0 0.0
    %31 = vmatpush1.msra.mxu0 0.0
    %32 = vmatprep.subr.mxu0 0.0
    %33 = vmatpush1.msra.mxu0 0.0
    %34 = vmatprep.subr.mxu0 0.0
    %35 = vmatpush1.msra.mxu0 0.0
    %36 = vmatprep.subr.mxu0 0.0
    %37 = vmatpush1.msra.mxu0 0.0
    %38 = vmatprep.subr.mxu0 0.0
    %39 = vmatpush1.msra.mxu0 0.0
    %40 = vmatprep.subr.mxu0 0.0
    %41 = vmatpush1.msra.mxu0 0.0
    %42 = vmatprep.subr.mxu0 0.0
    %43 = vmatpush1.msra.mxu0 0.0
    %44 = vmatprep.subr.mxu0 0.0
    %45 = vmatpush1.msra.mxu0 0.0
    %46 = vmatprep.subr.mxu0 0.0
    %47 = vmatpush1.msra.mxu0 0.0
    %48 = vmatprep.subr.mxu0 0.0
    %49 = vmatpush1.msra.mxu0 %v19
    %50 = vmatprep.subr.mxu0 0.0
    %51 = vmatpush1.msra.mxu0 %v18
    %52 = vmatprep.subr.mxu0 0.0
    %53 = vmatpush1.msra.mxu0 %v17
    %54 = vmatprep.subr.mxu0 0.0
    %55 = vmatpush1.msra.mxu0 %v16
    %56 = vmatprep.subr.mxu0 0.0
    %57 = vmatpush2.msra.mxu0 0.0
    %58 = vmatprep.subr.mxu0 0.0
    %59 = vmatpush2.msra.mxu0 0.0
    %60 = vmatprep.subr.mxu0 0.0
    %61 = vmatpush2.msra.mxu0 0.0
    %62 = vmatprep.subr.mxu0 0.0
    %63 = vmatpush2.msra.mxu0 0.0
    %64 = vmatprep.subr.mxu0 0.0
    %65 = vmatpush2.msra.mxu0 0.0
    %66 = vmatprep.subr.mxu0 0.0
    %67 = vmatpush2.msra.mxu0 0.0
    %68 = vmatprep.subr.mxu0 0.0
    %69 = vmatpush2.msra.mxu0 0.0
    %70 = vmatprep.subr.mxu0 0.0
    %71 = vmatpush2.msra.mxu0 0.0
    %72 = vmatprep.subr.mxu0 0.0
    %73 = vmatpush2.msra.mxu0 0.0
    %74 = vmatprep.subr.mxu0 0.0
    %75 = vmatpush2.msra.mxu0 0.0
    %76 = vmatprep.subr.mxu0 0.0
    %77 = vmatpush2.msra.mxu0 0.0
    %78 = vmatprep.subr.mxu0 0.0
    %79 = vmatpush2.msra.mxu0 0.0
    %80 = vmatprep.subr.mxu0 0.0
    %81 = vmatpush2.msra.mxu0 0.0
    %82 = vmatprep.subr.mxu0 0.0
    %83 = vmatpush2.msra.mxu0 0.0
    %84 = vmatprep.subr.mxu0 0.0
    %85 = vmatpush2.msra.mxu0 0.0
    %86 = vmatprep.subr.mxu0 0.0
    %87 = vmatpush2.msra.mxu0 0.0
    %88 = vmatprep.mubr.f32.mxu0 0.0
    %89 = vmatmul.mubr.f32.gmra.mxu0 %v22
    %v90 = vpop.f32.mrf.mxu0
    %v91 = vadd.f32 0.0, %v90
    %v92 = vpop.f32.mrf.mxu0
    %93 = vdwg.mxu0
    %v94 = vmul.f32 %v91, 2.0
    %vm95 = vcmask 130048
    %v96 = vsel %vm95, %v94, -inf
    %97 = vmax.xlane.f32.xlu0 %v96
    %v98 = vpop.xlane.xlu0 %97
    %v99 = vsub.f32 %v94, %v98
    %v100 = vld [vmem:[%s1] sm:$0xff]
    %v101 = vmul.f32 %v15, %v100
    %v102 = vsel %vm20, %v101, 0.0
    %103 = vadd.xlane.f32.xlu0 %v102
    %v104 = vpop.xlane.xlu0 %103
    %v105 = vmul.f32 %v104, 2.0
    %v106 = vsub.f32 %v105, %v98
    %v107 = vlaneseq
    %v108 = vand.u32 %v107, 127
    %s109 = smul.u32 0, 8
    %v110 = vlaneseq
    %v111 = vshrl.u32 %v110, 7
    %v112 = vstv %s109
    %v113 = vadd.s32 %v112, %v111
    %vm114 = vcmp.ne.s32.totalorder %v108, %v113
    %v115 = vmul.f32 %v99, 1.442695
    %v116 = vpow.pop %v115
    %v117 = vsel %vm114, %v116, 0.0
    %v118 = vsel %vm95, %v117, 0.0
    %119 = vadd.xlane.f32.xlu0 %v118
    %v120 = vpop.xlane.xlu0 %119
    %v121 = vadd.f32 %v120, 1.1920929e-07
    %v122 = vlog2.pop %v121
    %v123 = vmul.f32 %v122, 0.6931472
    %v124 = vsub.f32 %v123, %v106
    %vm125 = vcmp.lt.s32.totalorder %v113, 8
    %v126 = vsel %vm125, %v124, 0.0
    %vm127 = vcmask 7168
    %v128 = vsel %vm127, %v126, 0.0
    %129 = vadd.xlane.f32.xlu0 %v128
    %v130 = vpop.xlane.xlu0 %129
    %v131 = vrot.slane %v130, 4
    %v132 = vadd.f32 %v130, %v131
    %v133 = vrot.slane %v132, 2
    %v134 = vadd.f32 %v132, %v133
    %v135 = vrot.slane %v134, 1
    %v136 = vadd.f32 %v134, %v135
    %s137 = vtos %v136
    %v138 = vstv %s137
    %139 = vst [vmem:[#allocation2] sm:$0x1] %v138
    // Predicated region
    $region14: #{tpu_custom_call.1} parent=1 // pred_check
      _
    $region15: #{tpu_custom_call.1} parent=1 // pred_check_branch
      %141 = sbr.rel (0) target = $region17
    $region16: #{tpu_custom_call.1} parent=1 // pred_region
      %s143 = ssub.s32 16, 16
      %144 = vsyncadd [#allocation3], %s143
      %s146 = sshll.u32 [#allocation2], 4
      %s147 = int_to_ptr.vmem [resolvable:$true] %s146
      %149 = dma.vmem_to_hbm [thread:$0]  %s147, 16, %s3, [#allocation3]
    $region17: #{tpu_custom_call.1} parent=1 // pred_fallthru
      _
    // Predicated region
    $region18: #{tpu_custom_call.1} parent=1 // pred_check
      _
    $region19: #{tpu_custom_call.1} parent=1 // pred_check_branch
      %151 = sbr.rel (0) target = $region21
    $region20: #{tpu_custom_call.1} parent=1 // pred_region
      %152 = dma.done [#allocation3], 16
    $region21: #{tpu_custom_call.1} parent=1 // pred_fallthru
      _
    %153 = vsyncpa [#allocation3], 1

</llo_original>
